<compile_context>
chip_gen: v5e
topology: v5e:2x2
jax: 0.10.0
libtpu: 0.0.40
codegen_flags: <defaults>
</compile_context>

<pallas_src>
import numpy as np
import jax
import jax.numpy as jnp
from jax.experimental import pallas as pl
from jax.experimental.pallas import tpu as pltpu

N_JOINTS = 24
N_BETAS = 10
N_POSEFEAT = (N_JOINTS - 1) * 9  # 207
PARENTS = [0, 0, 0, 0, 1, 2, 3, 4, 5, 6, 7, 8, 9, 9, 9, 12, 13, 14,
           16, 17, 18, 19, 20, 21]
# Placeholder for the repo's ROOT_INIT_ROTVEC constant (root flipped about x).
ROOT_INIT_ROTVEC = np.array([np.pi, 0.0, 0.0], dtype=np.float32)


def _pick_tile(total, cap):
    """Largest multiple of 128 that divides `total` and is <= cap."""
    best = 128
    t = 128
    while t <= min(total, cap):
        if total % t == 0:
            best = t
        t += 128
    return best


# ----------------------------------------------------------------------------
# Host-side model preparation: pad N to a multiple of 128, build lane-dense
# coordinate-blocked (shape) and tile-interleaved (pose) weight layouts.
# ----------------------------------------------------------------------------
def build_model(v_template, shapedirs, posedirs, J_regressor, skin_weights,
                max_tile=2048):
    N = v_template.shape[0]
    Npad = ((N + 127) // 128) * 128
    padN = Npad - N
    tile_n = _pick_tile(Npad, max_tile)
    n_tiles = Npad // tile_n

    vt_cm = jnp.pad(v_template, ((0, padN), (0, 0))).T            # (3, Npad)
    # shapedirs: (N,3,10) -> (10, 3*Npad), coordinate-blocked [x|y|z].
    sd_flat = jnp.transpose(jnp.pad(shapedirs, ((0, padN), (0, 0), (0, 0))),
                            (2, 1, 0)).reshape(N_BETAS, 3 * Npad)
    # posedirs: (N,3,207) -> (207, 3*Npad), tile-interleaved so a (207,3*tile)
    # block holds x|y|z of the same vertex tile -> one fused in-kernel dot.
    pd_i = (jnp.transpose(jnp.pad(posedirs, ((0, padN), (0, 0), (0, 0))),
                          (2, 1, 0))                              # (207,3,Npad)
            .reshape(N_POSEFEAT, 3, n_tiles, tile_n)
            .transpose(0, 2, 1, 3)
            .reshape(N_POSEFEAT, 3 * Npad))
    jreg_t = jnp.pad(J_regressor, ((0, 0), (0, padN))).T          # (Npad, 24)
    wt = jnp.pad(skin_weights, ((0, padN), (0, 0))).T             # (24, Npad)

    return {
        'N': N, 'Npad': Npad, 'tile_n': tile_n,
        'vt_flat': vt_cm.reshape(1, 3 * Npad).astype(jnp.float32),
        'sd_flat': sd_flat.astype(jnp.bfloat16),                  # bf16 stream
        'pd_i': pd_i.astype(jnp.bfloat16),                        # bf16 stream
        'jreg_t': jreg_t.astype(jnp.float32),
        'wt': wt.astype(jnp.float32),
    }


# ----------------------------------------------------------------------------
# Pallas kernel 1: shape blendshapes (run once; betas shared across batch)
#   vs_flat = vt_flat + betas @ sd_flat     (1,10)x(10, 3*Npad), tiled on lanes
# ----------------------------------------------------------------------------
def _shape_blend_kernel(betas_ref, vt_ref, sd_ref, vs_ref):
    b16 = betas_ref[...].astype(jnp.bfloat16)                     # (1, 10)
    vs_ref[...] = vt_ref[...] + jnp.dot(
        b16, sd_ref[...], preferred_element_type=jnp.float32)


def shape_blend_pallas(shape_params, model):
    vt = model['vt_flat']
    sd = model['sd_flat']
    L = vt.shape[1]                                               # 3*Npad
    tA = _pick_tile(L, 4096)
    betas2 = shape_params.reshape(1, N_BETAS).astype(jnp.float32)
    return pl.pallas_call(
        _shape_blend_kernel,
        out_shape=jax.ShapeDtypeStruct((1, L), jnp.float32),
        grid=(L // tA,),
        in_specs=[
            pl.BlockSpec((1, N_BETAS), lambda t: (0, 0)),
            pl.BlockSpec((1, tA), lambda t: (0, t)),
            pl.BlockSpec((N_BETAS, tA), lambda t: (0, t)),
        ],
        out_specs=pl.BlockSpec((1, tA), lambda t: (0, t)),
        compiler_params=pltpu.CompilerParams(
            dimension_semantics=("parallel",)),
    )(betas2, vt, sd)


def shape_blend_ref(shape_params, model):
    betas2 = shape_params.reshape(1, N_BETAS).astype(jnp.float32)
    return model['vt_flat'] + betas2 @ model['sd_flat'].astype(jnp.float32)


# ----------------------------------------------------------------------------
# Pallas kernel 2: pose blendshapes + LBS skinning + scale/translate
#   grid over vertex tiles; batch folded into matmul M dimension.
#   vp_all = pose_feat @ pd_tile                 (B,207)x(207, 3*tile)
#   T      = Af @ w_tile                         (16B,24)x(24, tile)
#   out[b,i] = T[c=0,i]*vpx + T[c=1,i]*vpy + T[c=2,i]*vpz + T[c=3,i]
#   (Af rows are ordered b*16 + c*4 + i so each coefficient group is a
#    contiguous (4, tile) slab.)
# ----------------------------------------------------------------------------
def _lbs_kernel(pf_ref, vs_ref, af_ref, pd_ref, w_ref,
                scale_ref, trans_ref, out_ref):
    B = pf_ref.shape[0]
    tB = vs_ref.shape[1]

    pf16 = pf_ref[...].astype(jnp.bfloat16)                       # (B, 207)
    vp_all = jnp.dot(pf16, pd_ref[...],
                     preferred_element_type=jnp.float32)          # (B, 3*tB)
    vs = vs_ref[...]                                              # (3, tB)
    vpx = vp_all[:, 0 * tB:1 * tB] + vs[0:1, :]                   # (B, tB)
    vpy = vp_all[:, 1 * tB:2 * tB] + vs[1:2, :]
    vpz = vp_all[:, 2 * tB:3 * tB] + vs[2:3, :]

    T = jnp.dot(af_ref[...], w_ref[...],
                preferred_element_type=jnp.float32)               # (16B, tB)
    s = scale_ref[0]
    for b in range(B):                                            # static loop
        Tb = T[16 * b:16 * (b + 1)]                               # (16, tB)
        oh = (Tb[0:4] * vpx[b:b + 1, :]
              + Tb[4:8] * vpy[b:b + 1, :]
              + Tb[8:12] * vpz[b:b + 1, :]
              + Tb[12:16]) * s                                    # (4, tB)
        for i in range(3):
            out_ref[b, i:i + 1, :] = oh[i:i + 1, :] + trans_ref[b, i]


def lbs_pallas(pose_feat, vs_cm, Af, model, scale, adj_trans):
    B = pose_feat.shape[0]
    Npad = model['Npad']
    tB = model['tile_n']
    nT = Npad // tB
    return pl.pallas_call(
        _lbs_kernel,
        out_shape=jax.ShapeDtypeStruct((B, 3, Npad), jnp.float32),
        grid=(nT,),
        in_specs=[
            pl.BlockSpec((B, N_POSEFEAT), lambda t: (0, 0)),
            pl.BlockSpec((3, tB), lambda t: (0, t)),
            pl.BlockSpec((16 * B, N_JOINTS), lambda t: (0, 0)),
            pl.BlockSpec((N_POSEFEAT, 3 * tB), lambda t: (0, t)),
            pl.BlockSpec((N_JOINTS, tB), lambda t: (0, t)),
            pl.BlockSpec(memory_space=pltpu.MemorySpace.SMEM),    # scale (1,)
            pl.BlockSpec(memory_space=pltpu.MemorySpace.SMEM),    # adj_trans (B,3)
        ],
        out_specs=pl.BlockSpec((B, 3, tB), lambda t: (0, 0, t)),
        compiler_params=pltpu.CompilerParams(
            dimension_semantics=("parallel",)),
    )(pose_feat, vs_cm, Af, model['pd_i'], model['wt'], scale, adj_trans)


def lbs_ref(pose_feat, vs_cm, Af, model, scale, adj_trans):
    Npad, tB = model['Npad'], model['tile_n']
    nT = Npad // tB
    B = pose_feat.shape[0]
    pd = (model['pd_i'].astype(jnp.float32)
          .reshape(N_POSEFEAT, nT, 3, tB).transpose(0, 2, 1, 3)
          .reshape(N_POSEFEAT, 3, Npad))
    vp = vs_cm[None] + jnp.einsum('bf,fcn->bcn', pose_feat, pd)   # (B,3,Npad)
    T = (Af @ model['wt']).reshape(B, 4, 4, Npad)                 # (B,c,i,n)
    out = (T[:, 0, :3] * vp[:, 0:1] + T[:, 1, :3] * vp[:, 1:2]
           + T[:, 2, :3] * vp[:, 2:3] + T[:, 3, :3])
    return out * scale + adj_trans[:, :, None]


# ----------------------------------------------------------------------------
# JAX glue: Rodrigues + 24-joint kinematic chain (tiny, sequential)
# ----------------------------------------------------------------------------
def rodrigues(rvec):
    eps = 1e-8
    theta = jnp.sqrt(jnp.sum(rvec * rvec, axis=-1, keepdims=True) + eps)
    n = rvec / theta
    c = jnp.cos(theta)[..., None]
    s = jnp.sin(theta)[..., None]
    nx, ny, nz = n[..., 0], n[..., 1], n[..., 2]
    z = jnp.zeros_like(nx)
    K = jnp.stack([z, -nz, ny, nz, z, -nx, -ny, nx, z],
                  axis=-1).reshape(rvec.shape[:-1] + (3, 3))
    eye = jnp.eye(3, dtype=rvec.dtype)
    outer = n[..., :, None] * n[..., None, :]
    return c * eye + (1.0 - c) * outer + s * K


def kinematic_chain(R, J):
    B = R.shape[0]
    bottom = jnp.broadcast_to(
        jnp.array([0., 0., 0., 1.], R.dtype)[None, None, :], (B, 1, 4))

    def make_T(Rk, tk):
        top = jnp.concatenate([Rk, tk[:, :, None]], axis=2)
        return jnp.concatenate([top, bottom], axis=1)

    G = [make_T(R[:, 0], J[:, 0])]
    for k in range(1, N_JOINTS):
        p = PARENTS[k]
        G.append(jnp.einsum('bij,bjk->bik', G[p],
                            make_T(R[:, k], J[:, k] - J[:, p])))
    G = jnp.stack(G, axis=1)                                      # (B,24,4,4)
    Jtr = G[:, :, :3, 3]
    corr = jnp.einsum('bkij,bkj->bki', G[:, :, :3, :3], J)
    A = G.at[:, :, :3, 3].add(-corr)                              # remove rest pose
    return A, Jtr


# ----------------------------------------------------------------------------
# SMPLRetarget.forward equivalent
# ----------------------------------------------------------------------------
def smpl_retarget_forward(params, model, use_pallas=True):
    pose = params['pose_params']
    trans = params['trans']
    scale = params['scale']
    offset = params['offset']
    B = pose.shape[0]
    N, Npad = model['N'], model['Npad']

    # Shape blend runs once: shape_params are shared across the batch.
    shape_fn = shape_blend_pallas if use_pallas else shape_blend_ref
    vs_flat = shape_fn(params['shape_params'], model)             # (1, 3*Npad)
    vs_cm = vs_flat.reshape(3, Npad)

    # Joint regression is tiny -> plain JAX (padded rows/cols are zero).
    J1 = (vs_cm @ model['jreg_t']).T                              # (24, 3)
    J = jnp.broadcast_to(J1[None], (B, N_JOINTS, 3))

    R = rodrigues(pose.reshape(B, N_JOINTS, 3))                   # (B,24,3,3)
    pose_feat = (R[:, 1:] - jnp.eye(3, dtype=R.dtype)).reshape(B, N_POSEFEAT)

    A, Jtr = kinematic_chain(R, J)
    # TODO(synk): exact th_offset semantics of the modified SMPL_Layer are
    # unknown; here the joint offsets are applied to the rest joints before
    # running the kinematic chain.
    _, Jtr_off = kinematic_chain(R, J + offset[None])
    # Row order b*16 + c*4 + i, so T-dot output slices cleanly by column c.
    Af = jnp.transpose(A, (0, 3, 2, 1)).reshape(B * 16, N_JOINTS)

    center = Jtr[:, 0:1, :]                                       # center_idx=0
    adj_trans = trans - center[:, 0, :] * scale                   # fold centering

    lbs_fn = lbs_pallas if use_pallas else lbs_ref
    verts_cm = lbs_fn(pose_feat, vs_cm, Af, model, scale, adj_trans)
    verts = jnp.swapaxes(verts_cm[:, :, :N], 1, 2)                # (B,N,3)

    Jtr_out = (Jtr - center) * scale + trans[:, None, :]
    Jtr_off_out = (Jtr_off - center) * scale + trans[:, None, :]
    return verts, Jtr_out, Jtr_off_out


# ----------------------------------------------------------------------------
if __name__ == "__main__":
    key = jax.random.PRNGKey(0)
    B, N = 2, 512  # small synthetic SMPL (real model has 6890 verts)
    k = jax.random.split(key, 8)

    # Synthetic, deterministic SMPL model assets.
    v_template = jax.random.normal(k[0], (N, 3), jnp.float32)
    shapedirs = 0.03 * jax.random.normal(k[1], (N, 3, N_BETAS), jnp.float32)
    posedirs = 0.01 * jax.random.normal(k[2], (N, 3, N_POSEFEAT), jnp.float32)
    J_regressor = jax.nn.softmax(
        jax.random.normal(k[3], (N_JOINTS, N), jnp.float32), axis=-1)
    skin_weights = jax.nn.softmax(
        4.0 * jax.random.normal(k[4], (N, N_JOINTS), jnp.float32), axis=-1)

    model = build_model(v_template, shapedirs, posedirs, J_regressor,
                        skin_weights)

    # Parameters per SMPLRetarget.__init__ (plus a small deterministic pose
    # perturbation to emulate a mid-optimization state and exercise the
    # pose-blendshape path).
    pose = jnp.zeros((B, 72), jnp.float32).at[:, :3].set(
        jnp.asarray(ROOT_INIT_ROTVEC))
    pose = pose + 0.1 * jax.random.normal(k[5], (B, 72), jnp.float32)
    params = {
        'pose_params': pose,
        'trans': jnp.zeros((B, 3), jnp.float32),
        'shape_params': jnp.ones((N_BETAS,), jnp.float32),  # OPTIMIZE_SHAPE=True
        'scale': jnp.ones((1,), jnp.float32),
        'offset': jnp.zeros((N_JOINTS, 3), jnp.float32),
    }

    verts, Jtr, Jtr_off = jax.block_until_ready(
        smpl_retarget_forward(params, model, use_pallas=True))

    # Verify against a pure-JAX reference of the same math / same bf16 weights.
    verts_r, Jtr_r, Jtr_off_r = jax.block_until_ready(
        smpl_retarget_forward(params, model, use_pallas=False))
    assert verts.shape == (B, N, 3) and Jtr.shape == (B, N_JOINTS, 3)
    np.testing.assert_allclose(np.asarray(verts), np.asarray(verts_r),
                               rtol=1e-2, atol=1e-2)
    np.testing.assert_allclose(np.asarray(Jtr), np.asarray(Jtr_r),
                               rtol=1e-2, atol=1e-2)
    np.testing.assert_allclose(np.asarray(Jtr_off), np.asarray(Jtr_off_r),
                               rtol=1e-2, atol=1e-2)

    print("KERNEL_OK")
</pallas_src>

<mosaic_0001>
module attributes {stable_mosaic.version = 11 : i64} {
  func.func @_shape_blend_kernel(%arg0: i32, %arg1: memref<1x10xf32, #tpu.memory_space<vmem>>, %arg2: memref<1x1536xf32, #tpu.memory_space<vmem>>, %arg3: memref<10x1536xbf16, #tpu.memory_space<vmem>>, %arg4: memref<1x1536xf32, #tpu.memory_space<vmem>>) attributes {dimension_semantics = [#tpu.dimension_semantics<parallel>], iteration_bounds = array<i64: 1>, scalar_prefetch = 0 : i64, scratch_operands = 0 : i64, tpu.core_type = #tpu.core_type<tc>, window_params = [{pipeline_mode = #tpu.pipeline_mode<synchronous>, transform_indices = @transform_0, window_bounds = array<i64: 1, 10>}, {transform_indices = @transform_1, window_bounds = array<i64: 1, 1536>}, {transform_indices = @transform_2, window_bounds = array<i64: 10, 1536>}, {transform_indices = @transform_3, window_bounds = array<i64: 1, 1536>}]} {
    %c0 = arith.constant 0 : index
    %c0_0 = arith.constant 0 : index
    %0 = vector.load %arg1[%c0, %c0_0] : memref<1x10xf32, #tpu.memory_space<vmem>>, vector<1x10xf32>
    %1 = arith.truncf %0 : vector<1x10xf32> to vector<1x10xbf16>
    %c0_1 = arith.constant 0 : index
    %c0_2 = arith.constant 0 : index
    %2 = vector.load %arg2[%c0_1, %c0_2] : memref<1x1536xf32, #tpu.memory_space<vmem>>, vector<1x1536xf32>
    %c0_3 = arith.constant 0 : index
    %c0_4 = arith.constant 0 : index
    %3 = vector.load %arg3[%c0_3, %c0_4] : memref<10x1536xbf16, #tpu.memory_space<vmem>>, vector<10x1536xbf16>
    %cst = arith.constant dense<0.000000e+00> : vector<1x1536xf32>
    %4 = tpu.matmul %1, %3, %cst {dimension_numbers = #tpu.dot_dimension_numbers<[1], [0], [0], [1], [0, 0, 1, 1], [], []>} : vector<1x10xbf16>, vector<10x1536xbf16>, vector<1x1536xf32> -> vector<1x1536xf32>
    %5 = arith.addf %2, %4 : vector<1x1536xf32>
    %c0_5 = arith.constant 0 : index
    %c0_6 = arith.constant 0 : index
    %6 = vector.load %arg4[%c0_5, %c0_6] : memref<1x1536xf32, #tpu.memory_space<vmem>>, vector<1x1536xf32>
    tpu.vector_store %arg4[%c0_5, %c0_6], %5 {strides = array<i32>} : memref<1x1536xf32, #tpu.memory_space<vmem>>, vector<1x1536xf32>,
    return
  }
  func.func @transform_0(%arg0: i32) -> (i32, i32) {
    %c0_i32 = arith.constant 0 : i32
    %c0_i32_0 = arith.constant 0 : i32
    %c0_i32_1 = arith.constant 0 : i32
    return %c0_i32, %c0_i32_0 : i32, i32
  }
  func.func @transform_1(%arg0: i32) -> (i32, i32) {
    %c0_i32 = arith.constant 0 : i32
    %c0_i32_0 = arith.constant 0 : i32
    return %c0_i32, %arg0 : i32, i32
  }
  func.func @transform_2(%arg0: i32) -> (i32, i32) {
    %c0_i32 = arith.constant 0 : i32
    %c0_i32_0 = arith.constant 0 : i32
    return %c0_i32, %arg0 : i32, i32
  }
  func.func @transform_3(%arg0: i32) -> (i32, i32) {
    %c0_i32 = arith.constant 0 : i32
    %c0_i32_0 = arith.constant 0 : i32
    return %c0_i32, %arg0 : i32, i32
  }
}

</mosaic_0001>

<llo_original>
// kernel: tpu_custom_call.1
$region0: #{tpu_custom_call.1}
  #allocation0 [shape = 'u32[]', space=smem, size = 0x4, offset = 0x4, fixed_abs, tag = 'smem constant byte address 0x4 - core index']
  #allocation1 [shape = 'u32[72,128]{1,0:T(1,128)}', space=vmem, size = 0x9000, scoped, tag = 'internal scratch']
  %s0 = inlined_call_operand.hbm [shape: f32[1,10], index: 0, kind: input, shape index: {}]
  %s1 = inlined_call_operand.hbm [shape: f32[1,1536], index: 1, kind: input, shape index: {}]
  %s2 = inlined_call_operand.hbm [shape: bf16[10,1536], index: 2, kind: input, shape index: {}]
  %s3 = inlined_call_operand.hbm [shape: f32[1,1536], index: 3, kind: output, shape index: {}]
  %s4 = sld [smem:[#allocation0]]
  $region34: #{tpu_custom_call.1} parent=0
    _
  %s6 = ssub.s32 1, %s4
  %s7 = scalar_select 0, %s6, %s4
  $region1: #{tpu_custom_call.1} parent=0
    #allocation2 [shape = 'u8[512]{0}', space=vmem, size = 0x400, scoped, tag = 'input window, operand 0, single buffered']
    #allocation3 [shape = 's32[1]{0}', space=sflag, size = 0x4, scoped, tag = 'scoped memory for tpu_custom_call.1']
    #allocation4 [shape = 's32[1]{0}', space=sflag, size = 0x4, scoped, tag = 'scoped memory for tpu_custom_call.1']
    #allocation5 [shape = 'u8[6144]{0}', space=vmem, size = 0x1800, scoped, tag = 'input window, operand 1, single buffered']
    #allocation6 [shape = 's32[1]{0}', space=sflag, size = 0x4, scoped, tag = 'scoped memory for tpu_custom_call.1']
    #allocation7 [shape = 'u8[49152]{0}', space=vmem, size = 0xc000, scoped, tag = 'input window, operand 2, single buffered']
    #allocation8 [shape = 'u8[6144]{0}', space=vmem, size = 0x1800, scoped, tag = 'output window, operand 0, single buffered']
    %8 = vsyncpa [#allocation3], 0
    %9 = vsyncpa [#allocation6], 0
    %10 = vsyncpa [#allocation4], 0
    // Predicated region
    $region2: #{tpu_custom_call.1} parent=1 // pred_check
      _
    $region3: #{tpu_custom_call.1} parent=1 // pred_check_branch
      %12 = sbr.rel (0) target = $region5
    $region4: #{tpu_custom_call.1} parent=1 // pred_region
      %14 = vsyncadd [#allocation3], 0
      %s16 = sshll.u32 %s0, 4
      %s17 = int_to_ptr.hbm [resolvable:$true] %s16
      %s18 = sshll.u32 [#allocation2], 4
      %s19 = int_to_ptr.vmem [resolvable:$true] %s18
      %21 = dma.hbm_to_vmem [thread:$0]  %s17, 16, %s19, [#allocation3]
    $region5: #{tpu_custom_call.1} parent=1 // pred_fallthru
      _
    // Predicated region
    $region6: #{tpu_custom_call.1} parent=1 // pred_check
      _
    $region7: #{tpu_custom_call.1} parent=1 // pred_check_branch
      %23 = sbr.rel (0) target = $region9
    $region8: #{tpu_custom_call.1} parent=1 // pred_region
      %25 = vsyncadd [#allocation6], 0
      %s27 = sshll.u32 %s1, 4
      %s28 = int_to_ptr.hbm [resolvable:$true] %s27
      %s29 = sshll.u32 [#allocation5], 4
      %s30 = int_to_ptr.vmem [resolvable:$true] %s29
      %32 = dma.hbm_to_vmem [thread:$0]  %s28, 192, %s30, [#allocation6]
    $region9: #{tpu_custom_call.1} parent=1 // pred_fallthru
      _
    // Predicated region
    $region10: #{tpu_custom_call.1} parent=1 // pred_check
      _
    $region11: #{tpu_custom_call.1} parent=1 // pred_check_branch
      %34 = sbr.rel (0) target = $region13
    $region12: #{tpu_custom_call.1} parent=1 // pred_region
      %36 = vsyncadd [#allocation6], 0
      %s37 = sshll.u32 %s2, 4
      %s38 = int_to_ptr.hbm [resolvable:$true] %s37
      %s39 = sshll.u32 [#allocation7], 4
      %s40 = int_to_ptr.vmem [resolvable:$true] %s39
      %45 = dma.hbm_to_vmem [thread:$0]  %s38, 1536, %s40, [#allocation6], 768, 768, 48
    $region13: #{tpu_custom_call.1} parent=1 // pred_fallthru
      _
    // Predicated region
    $region14: #{tpu_custom_call.1} parent=1 // pred_check
      _
    $region15: #{tpu_custom_call.1} parent=1 // pred_check_branch
      %47 = sbr.rel (0) target = $region17
    $region16: #{tpu_custom_call.1} parent=1 // pred_region
      %49 = dma.done [#allocation3], 16
    $region17: #{tpu_custom_call.1} parent=1 // pred_fallthru
      _
    // Predicated region
    $region18: #{tpu_custom_call.1} parent=1 // pred_check
      _
    $region19: #{tpu_custom_call.1} parent=1 // pred_check_branch
      %51 = sbr.rel (0) target = $region21
    $region20: #{tpu_custom_call.1} parent=1 // pred_region
      %53 = dma.done [#allocation6], 192
    $region21: #{tpu_custom_call.1} parent=1 // pred_fallthru
      _
    // Predicated region
    $region22: #{tpu_custom_call.1} parent=1 // pred_check
      _
    $region23: #{tpu_custom_call.1} parent=1 // pred_check_branch
      %55 = sbr.rel (0) target = $region25
    $region24: #{tpu_custom_call.1} parent=1 // pred_region
      %57 = dma.done [#allocation6], 1536
    $region25: #{tpu_custom_call.1} parent=1 // pred_fallthru
      _
    %v59 = vld [vmem:[#allocation2] sm:$0x1]
    %v60 = vpack.c.bf16 %v59, %v59
    %v61 = vld [vmem:[#allocation5] sm:$0xff]
    %v62 = vld [vmem:[#allocation5 + $0x8] sm:$0xf]
    %v63 = vld [vmem:[#allocation7] sm:$0xff]
    %v64 = vld [vmem:[#allocation7 + $0x8] sm:$0xff]
    %v65 = vld [vmem:[#allocation7 + $0x10] sm:$0xff]
    %v66 = vld [vmem:[#allocation7 + $0x18] sm:$0xff]
    %v67 = vld [vmem:[#allocation7 + $0x20] sm:$0xff]
    %v68 = vld [vmem:[#allocation7 + $0x28] sm:$0xff]
    %v69 = vld [vmem:[#allocation7 + $0x30] sm:$0x11]
    %v70 = vld [vmem:[#allocation7 + $0x38] sm:$0x11]
    %v71 = vld [vmem:[#allocation7 + $0x40] sm:$0x11]
    %v72 = vld [vmem:[#allocation7 + $0x48] sm:$0x11]
    %v73 = vld [vmem:[#allocation7 + $0x50] sm:$0x11]
    %v74 = vld [vmem:[#allocation7 + $0x58] sm:$0x11]
    %v87 = vunpack.c.l.b16 %v63
    %v88 = vunpack.c.h.b16 %v63
    %v89 = vunpack.c.l.b16 %v64
    %v90 = vunpack.c.h.b16 %v64
    %v91 = vunpack.c.l.b16 %v65
    %v92 = vunpack.c.h.b16 %v65
    %v93 = vunpack.c.l.b16 %v66
    %v94 = vunpack.c.h.b16 %v66
    %v95 = vunpack.c.l.b16 %v67
    %v96 = vunpack.c.h.b16 %v67
    %v97 = vunpack.c.l.b16 %v68
    %v98 = vunpack.c.h.b16 %v68
    %v99 = vunpack.c.l.b16 %v69
    %v100 = vunpack.c.h.b16 %v69
    %v101 = vunpack.c.l.b16 %v70
    %v102 = vunpack.c.h.b16 %v70
    %v103 = vunpack.c.l.b16 %v71
    %v104 = vunpack.c.h.b16 %v71
    %v105 = vunpack.c.l.b16 %v72
    %v106 = vunpack.c.h.b16 %v72
    %v107 = vunpack.c.l.b16 %v73
    %v108 = vunpack.c.h.b16 %v73
    %v109 = vunpack.c.l.b16 %v74
    %v110 = vunpack.c.h.b16 %v74
    %v111 = vpack.c.b16 %v99, %v87
    %v112 = vpack.c.b16 %v100, %v88
    %v113 = vpack.c.b16 %v101, %v89
    %v114 = vpack.c.b16 %v102, %v90
    %v115 = vpack.c.b16 %v103, %v91
    %v116 = vpack.c.b16 %v104, %v92
    %v117 = vpack.c.b16 %v105, %v93
    %v118 = vpack.c.b16 %v106, %v94
    %v119 = vpack.c.b16 %v107, %v95
    %v120 = vpack.c.b16 %v108, %v96
    %v121 = vpack.c.b16 %v109, %v97
    %v122 = vpack.c.b16 %v110, %v98
    %vm123 = vcmask 80896
    %v125 = vsel %vm123, %v60, 0
    %vm127 = vcmask 1044480
    %v129 = vsel %vm127, %v111, 0
    %v132 = vsel %vm127, %v112, 0
    %v135 = vsel %vm127, %v113, 0
    %v138 = vsel %vm127, %v114, 0
    %v141 = vsel %vm127, %v115, 0
    %v144 = vsel %vm127, %v116, 0
    %v147 = vsel %vm127, %v117, 0
    %v150 = vsel %vm127, %v118, 0
    %v153 = vsel %vm127, %v119, 0
    %v156 = vsel %vm127, %v120, 0
    %v159 = vsel %vm127, %v121, 0
    %v162 = vsel %vm127, %v122, 0
    %164 = vmatpush.bf16.msra.mxu0 0
    %165 = vmatpush.bf16.msra.mxu0 0
    %166 = vmatpush.bf16.msra.mxu0 0
    %167 = vmatpush.bf16.msra.mxu0 0
    %168 = vmatpush.bf16.msra.mxu0 0
    %169 = vmatpush.bf16.msra.mxu0 0
    %170 = vmatpush.bf16.msra.mxu0 0
    %171 = vmatpush.bf16.msra.mxu0 %v129
    %172 = vmatmul.bf16.gmra.mxu0 %v125
    %v173 = vpop.f32.mrf.mxu0
    %v174 = vadd.f32 0.0, %v173
    %v175 = vpop.f32.mrf.mxu0
    %176 = vdwg.mxu0
    %177 = vmatpush.bf16.msra.mxu0 0
    %178 = vmatpush.bf16.msra.mxu0 0
    %179 = vmatpush.bf16.msra.mxu0 0
    %180 = vmatpush.bf16.msra.mxu0 0
    %181 = vmatpush.bf16.msra.mxu0 0
    %182 = vmatpush.bf16.msra.mxu0 0
    %183 = vmatpush.bf16.msra.mxu0 0
    %184 = vmatpush.bf16.msra.mxu0 %v132
    %185 = vmatmul.bf16.gmra.mxu0 %v125
    %v186 = vpop.f32.mrf.mxu0
    %v187 = vadd.f32 0.0, %v186
    %v188 = vpop.f32.mrf.mxu0
    %189 = vdwg.mxu0
    %190 = vmatpush.bf16.msra.mxu0 0
    %191 = vmatpush.bf16.msra.mxu0 0
    %192 = vmatpush.bf16.msra.mxu0 0
    %193 = vmatpush.bf16.msra.mxu0 0
    %194 = vmatpush.bf16.msra.mxu0 0
    %195 = vmatpush.bf16.msra.mxu0 0
    %196 = vmatpush.bf16.msra.mxu0 0
    %197 = vmatpush.bf16.msra.mxu0 %v135
    %198 = vmatmul.bf16.gmra.mxu0 %v125
    %v199 = vpop.f32.mrf.mxu0
    %v200 = vadd.f32 0.0, %v199
    %v201 = vpop.f32.mrf.mxu0
    %202 = vdwg.mxu0
    %203 = vmatpush.bf16.msra.mxu0 0
    %204 = vmatpush.bf16.msra.mxu0 0
    %205 = vmatpush.bf16.msra.mxu0 0
    %206 = vmatpush.bf16.msra.mxu0 0
    %207 = vmatpush.bf16.msra.mxu0 0
    %208 = vmatpush.bf16.msra.mxu0 0
    %209 = vmatpush.bf16.msra.mxu0 0
    %210 = vmatpush.bf16.msra.mxu0 %v138
    %211 = vmatmul.bf16.gmra.mxu0 %v125
    %v212 = vpop.f32.mrf.mxu0
    %v213 = vadd.f32 0.0, %v212
    %v214 = vpop.f32.mrf.mxu0
    %215 = vdwg.mxu0
    %216 = vmatpush.bf16.msra.mxu0 0
    %217 = vmatpush.bf16.msra.mxu0 0
    %218 = vmatpush.bf16.msra.mxu0 0
    %219 = vmatpush.bf16.msra.mxu0 0
    %220 = vmatpush.bf16.msra.mxu0 0
    %221 = vmatpush.bf16.msra.mxu0 0
    %222 = vmatpush.bf16.msra.mxu0 0
    %223 = vmatpush.bf16.msra.mxu0 %v141
    %224 = vmatmul.bf16.gmra.mxu0 %v125
    %v225 = vpop.f32.mrf.mxu0
    %v226 = vadd.f32 0.0, %v225
    %v227 = vpop.f32.mrf.mxu0
    %228 = vdwg.mxu0
    %229 = vmatpush.bf16.msra.mxu0 0
    %230 = vmatpush.bf16.msra.mxu0 0
    %231 = vmatpush.bf16.msra.mxu0 0
    %232 = vmatpush.bf16.msra.mxu0 0
    %233 = vmatpush.bf16.msra.mxu0 0
    %234 = vmatpush.bf16.msra.mxu0 0
    %235 = vmatpush.bf16.msra.mxu0 0
    %236 = vmatpush.bf16.msra.mxu0 %v144
    %237 = vmatmul.bf16.gmra.mxu0 %v125
    %v238 = vpop.f32.mrf.mxu0
    %v239 = vadd.f32 0.0, %v238
    %v240 = vpop.f32.mrf.mxu0
    %241 = vdwg.mxu0
    %242 = vmatpush.bf16.msra.mxu0 0
    %243 = vmatpush.bf16.msra.mxu0 0
    %244 = vmatpush.bf16.msra.mxu0 0
    %245 = vmatpush.bf16.msra.mxu0 0
    %246 = vmatpush.bf16.msra.mxu0 0
    %247 = vmatpush.bf16.msra.mxu0 0
    %248 = vmatpush.bf16.msra.mxu0 0
    %249 = vmatpush.bf16.msra.mxu0 %v147
    %250 = vmatmul.bf16.gmra.mxu0 %v125
    %v251 = vpop.f32.mrf.mxu0
    %v252 = vadd.f32 0.0, %v251
    %v253 = vpop.f32.mrf.mxu0
    %254 = vdwg.mxu0
    %255 = vmatpush.bf16.msra.mxu0 0
    %256 = vmatpush.bf16.msra.mxu0 0
    %257 = vmatpush.bf16.msra.mxu0 0
    %258 = vmatpush.bf16.msra.mxu0 0
    %259 = vmatpush.bf16.msra.mxu0 0
    %260 = vmatpush.bf16.msra.mxu0 0
    %261 = vmatpush.bf16.msra.mxu0 0
    %262 = vmatpush.bf16.msra.mxu0 %v150
    %263 = vmatmul.bf16.gmra.mxu0 %v125
    %v264 = vpop.f32.mrf.mxu0
    %v265 = vadd.f32 0.0, %v264
    %v266 = vpop.f32.mrf.mxu0
    %267 = vdwg.mxu0
    %268 = vmatpush.bf16.msra.mxu0 0
    %269 = vmatpush.bf16.msra.mxu0 0
    %270 = vmatpush.bf16.msra.mxu0 0
    %271 = vmatpush.bf16.msra.mxu0 0
    %272 = vmatpush.bf16.msra.mxu0 0
    %273 = vmatpush.bf16.msra.mxu0 0
    %274 = vmatpush.bf16.msra.mxu0 0
    %275 = vmatpush.bf16.msra.mxu0 %v153
    %276 = vmatmul.bf16.gmra.mxu0 %v125
    %v277 = vpop.f32.mrf.mxu0
    %v278 = vadd.f32 0.0, %v277
    %v279 = vpop.f32.mrf.mxu0
    %280 = vdwg.mxu0
    %281 = vmatpush.bf16.msra.mxu0 0
    %282 = vmatpush.bf16.msra.mxu0 0
    %283 = vmatpush.bf16.msra.mxu0 0
    %284 = vmatpush.bf16.msra.mxu0 0
    %285 = vmatpush.bf16.msra.mxu0 0
    %286 = vmatpush.bf16.msra.mxu0 0
    %287 = vmatpush.bf16.msra.mxu0 0
    %288 = vmatpush.bf16.msra.mxu0 %v156
    %289 = vmatmul.bf16.gmra.mxu0 %v125
    %v290 = vpop.f32.mrf.mxu0
    %v291 = vadd.f32 0.0, %v290
    %v292 = vpop.f32.mrf.mxu0
    %293 = vdwg.mxu0
    %294 = vmatpush.bf16.msra.mxu0 0
    %295 = vmatpush.bf16.msra.mxu0 0
    %296 = vmatpush.bf16.msra.mxu0 0
    %297 = vmatpush.bf16.msra.mxu0 0
    %298 = vmatpush.bf16.msra.mxu0 0
    %299 = vmatpush.bf16.msra.mxu0 0
    %300 = vmatpush.bf16.msra.mxu0 0
    %301 = vmatpush.bf16.msra.mxu0 %v159
    %302 = vmatmul.bf16.gmra.mxu0 %v125
    %v303 = vpop.f32.mrf.mxu0
    %v304 = vadd.f32 0.0, %v303
    %v305 = vpop.f32.mrf.mxu0
    %306 = vdwg.mxu0
    %307 = vmatpush.bf16.msra.mxu0 0
    %308 = vmatpush.bf16.msra.mxu0 0
    %309 = vmatpush.bf16.msra.mxu0 0
    %310 = vmatpush.bf16.msra.mxu0 0
    %311 = vmatpush.bf16.msra.mxu0 0
    %312 = vmatpush.bf16.msra.mxu0 0
    %313 = vmatpush.bf16.msra.mxu0 0
    %314 = vmatpush.bf16.msra.mxu0 %v162
    %315 = vmatmul.bf16.gmra.mxu0 %v125
    %v316 = vpop.f32.mrf.mxu0
    %v317 = vadd.f32 0.0, %v316
    %v318 = vpop.f32.mrf.mxu0
    %319 = vdwg.mxu0
    %v332 = vrot.slane %v187, 7
    %v333 = vrot.slane %v200, 6
    %v334 = vrot.slane %v213, 5
    %v335 = vrot.slane %v226, 4
    %v336 = vrot.slane %v239, 3
    %v337 = vrot.slane %v252, 2
    %v338 = vrot.slane %v265, 1
    %v339 = vrot.slane %v291, 7
    %v340 = vrot.slane %v304, 6
    %v341 = vrot.slane %v317, 5
    %vm342 = vcmask 1040384
    %v343 = vsel %vm342, %v174, %v332
    %vm344 = vcmask 1042434
    %v345 = vsel %vm344, %v333, %v334
    %vm346 = vcmask 1041408
    %v347 = vsel %vm346, %v343, %v345
    %vm348 = vcmask 1044484
    %v349 = vsel %vm348, %v335, %v336
    %vm350 = vcmask 1046534
    %v351 = vsel %vm350, %v337, %v338
    %vm352 = vcmask 1045508
    %v353 = vsel %vm352, %v349, %v351
    %vm354 = vcmask 1043456
    %v355 = vsel %vm354, %v347, %v353
    %v356 = vsel %vm342, %v278, %v339
    %v357 = vsel %vm344, %v340, %v341
    %v358 = vsel %vm346, %v356, %v357
    %v361 = vadd.f32 %v61, %v355
    %v362 = vadd.f32 %v62, %v358
    %363 = vst [vmem:[#allocation8] sm:$0xff] %v361
    %v364 = vlaneseq
    %vm365 = vcmp.ge.s32.totalorder %v364, 0
    %vm366 = vcmp.lt.s32.totalorder %v364, 512
    %vm367 = vmand %vm365, %vm366
    %368 = vst.msk [vmem:[#allocation8 + $0x8] sm:$0xf] %vm367, %v362
    // Predicated region
    $region26: #{tpu_custom_call.1} parent=1 // pred_check
      _
    $region27: #{tpu_custom_call.1} parent=1 // pred_check_branch
      %370 = sbr.rel (0) target = $region29
    $region28: #{tpu_custom_call.1} parent=1 // pred_region
      %372 = vsyncadd [#allocation4], 0
      %s374 = sshll.u32 [#allocation8], 4
      %s375 = int_to_ptr.vmem [resolvable:$true] %s374
      %s376 = sshll.u32 %s3, 4
      %s377 = int_to_ptr.hbm [resolvable:$true] %s376
      %379 = dma.vmem_to_hbm [thread:$0]  %s375, 192, %s377, [#allocation4]
    $region29: #{tpu_custom_call.1} parent=1 // pred_fallthru
      _
    // Predicated region
    $region30: #{tpu_custom_call.1} parent=1 // pred_check
      _
    $region31: #{tpu_custom_call.1} parent=1 // pred_check_branch
      %381 = sbr.rel (0) target = $region33
    $region32: #{tpu_custom_call.1} parent=1 // pred_region
      %383 = dma.done [#allocation4], 192
    $region33: #{tpu_custom_call.1} parent=1 // pred_fallthru
      _
    %384 = vsyncpa [#allocation3], 1
    %385 = vsyncpa [#allocation6], 1
    %386 = vsyncpa [#allocation4], 1

</llo_original>
